<compile_context>
chip_gen: v7x
topology: tpu7x:2x2x1
jax: 0.10.0
libtpu: 0.0.40
codegen_flags: <defaults>
</compile_context>

<pallas_src>
from functools import partial

import jax
import jax.numpy as jnp
from jax import lax
from jax.experimental import pallas as pl
from jax.experimental.pallas import tpu as pltpu


def _round_up(x, m):
    return ((x + m - 1) // m) * m


def _fused_kernel(x_ref, w1bd_ref, b1_ref, w2t_ref, b2_ref, sel_ref, p_ref, o_ref,
                  *, inv_hw, eps2, neg_slope):
    # x_ref:  (TB*Cin_p, HW)       NCHW-native block, HW on lanes (lane-dense)
    # w1bd:   (TB*Ctot, TB*Cin_p)  block-diagonal: TB copies of w1^T (Cin zero-padded)
    # b1:     (TB*Ctot, 1)
    # w2t:    (TB*Ctot, D_pad)     TB row-tiled copies of w2 (D zero-padded)
    # b2:     (1, D_pad)
    # sel:    (TB, TB*Ctot)        one-hot row->sample selector
    # p:      (D_pad, D_pad)       block-diagonal class-group projection (zero in pad)
    # o_ref:  (TB, D_pad)

    # Fused backbones (concatenated 1x1 convs) + ReLU over every pixel:
    # one lane-dense MXU matmul for the whole sample block.
    feat = jnp.dot(w1bd_ref[...], x_ref[...], preferred_element_type=jnp.float32)
    feat = jnp.maximum(feat + b1_ref[...], 0.0)                     # (TB*Ctot, HW)

    # AdaptiveAvgPool2d((1,1)) hoisted before the second 1x1 conv (exact).
    pooled = jnp.sum(feat, axis=1, keepdims=True) * inv_hw          # (TB*Ctot, 1)

    # Second 1x1 conv on pooled features; Sel matmul regroups rows per sample.
    y = jnp.dot(sel_ref[...], pooled * w2t_ref[...],
                preferred_element_type=jnp.float32) + b2_ref[...]   # (TB, D_pad)

    # AkSplitDimNormalize: per-class-group L2 normalize * 0.1.
    # max(sqrt(ss), eps) == sqrt(max(ss, eps^2)); rsqrt runs on the EUP.
    denom_sq = jnp.dot(y * y, p_ref[...], preferred_element_type=jnp.float32)
    z = y * lax.rsqrt(jnp.maximum(denom_sq, eps2)) * 0.1

    # LeakyReLU(0.01)
    o_ref[...] = jnp.where(z > 0, z, neg_slope * z)


def multi_bn_forward(x_nchw, w1_raw, b1, w2, b2, *, num_classes, du_per_class,
                     tb_target=8):
    """x_nchw (N,Cin,H,W) f32; w1_raw (Cin,Ctot); b1 (Ctot,); w2 (Ctot,D); b2 (D,)."""
    N, Cin, H, W = x_nchw.shape
    HW = H * W
    Ctot = w1_raw.shape[1]
    D = num_classes * du_per_class
    assert w2.shape == (Ctot, D)

    Cin_p = _round_up(Cin, 8)     # sublane-aligned contraction; do NOT pad K to 128
    D_pad = _round_up(D, 128)     # lane-dense output (unmasked vst)

    # samples per grid step: whole (small) batch, else a multiple of 8
    TB = N if N <= tb_target else tb_target
    n_blocks = pl.cdiv(N, TB)
    N_pad = n_blocks * TB

    # NCHW is already (N, Cin, HW) after a free reshape -- no transpose pass over HBM.
    x3 = x_nchw.reshape(N, Cin, HW)
    x3 = jnp.pad(x3, ((0, N_pad - N), (0, Cin_p - Cin), (0, 0)))
    x_flat = x3.reshape(N_pad * Cin_p, HW)

    # Block-diagonal first weight: TB copies of w1^T (zero rows for padded Cin).
    w1t_p = jnp.zeros((Ctot, Cin_p), jnp.float32).at[:, :Cin].set(w1_raw.T)
    w1bd = jnp.kron(jnp.eye(TB, dtype=jnp.float32), w1t_p)          # (TB*Ctot, TB*Cin_p)
    b1_col = jnp.tile(b1.reshape(Ctot, 1).astype(jnp.float32), (TB, 1))

    # Second 1x1 conv weights, zero-padded on D and row-tiled per sample.
    w2_pad = jnp.zeros((Ctot, D_pad), jnp.float32).at[:, :D].set(w2)
    w2_tiled = jnp.tile(w2_pad, (TB, 1))                            # (TB*Ctot, D_pad)
    b2_row = jnp.zeros((1, D_pad), jnp.float32).at[0, :D].set(b2)

    # Selector collapsing (TB*Ctot) rows back to (TB, Ctot) via a single matmul.
    row_owner = jnp.arange(TB * Ctot) // Ctot
    sel = (jnp.arange(TB)[:, None] == row_owner[None, :]).astype(jnp.float32)

    # Block-diagonal class-group projection (zero rows/cols in the D pad).
    gid = jnp.arange(D) // du_per_class
    p_small = (gid[:, None] == gid[None, :]).astype(jnp.float32)
    proj = jnp.zeros((D_pad, D_pad), jnp.float32).at[:D, :D].set(p_small)

    kern = partial(_fused_kernel, inv_hw=1.0 / HW, eps2=1e-24, neg_slope=0.01)

    out = pl.pallas_call(
        kern,
        out_shape=jax.ShapeDtypeStruct((N_pad, D_pad), jnp.float32),
        grid_spec=pltpu.PrefetchScalarGridSpec(
            num_scalar_prefetch=0,
            grid=(n_blocks,),
            in_specs=[
                pl.BlockSpec((TB * Cin_p, HW), lambda i: (i, 0)),
                pl.BlockSpec(w1bd.shape, lambda i: (0, 0)),
                pl.BlockSpec(b1_col.shape, lambda i: (0, 0)),
                pl.BlockSpec(w2_tiled.shape, lambda i: (0, 0)),
                pl.BlockSpec(b2_row.shape, lambda i: (0, 0)),
                pl.BlockSpec(sel.shape, lambda i: (0, 0)),
                pl.BlockSpec(proj.shape, lambda i: (0, 0)),
            ],
            out_specs=pl.BlockSpec((TB, D_pad), lambda i: (i, 0)),
        ),
        compiler_params=pltpu.CompilerParams(
            dimension_semantics=("parallel",),       # shard sample blocks across TCs (v7x)
            vmem_limit_bytes=32 * 1024 * 1024,       # safe within v7x's 64 MiB physical VMEM
        ),
    )(x_flat, w1bd, b1_col, w2_tiled, b2_row, sel, proj)

    return out[:N, :D]


if __name__ == "__main__":
    # Small synthetic configuration (module fixes Cin=3 via its constructor probe).
    N, Cin, H, W = 2, 3, 16, 16
    num_backbones = 2
    C_backboneout = 8            # each synthetic backbone: Conv2d(3, 8, 1) + ReLU
    num_classes = 4
    du_per_class = 8
    Ctot = num_backbones * C_backboneout
    D = num_classes * du_per_class

    key = jax.random.PRNGKey(0)
    k0, k1, k2, k3, k4 = jax.random.split(key, 5)
    x = jax.random.normal(k0, (N, Cin, H, W), dtype=jnp.float32)

    # Deterministic synthetic parameters (no checkpoint load).
    w1_raw = jax.random.normal(k1, (Cin, Ctot), dtype=jnp.float32) * 0.1
    b1 = jax.random.normal(k2, (Ctot,), dtype=jnp.float32) * 0.1
    w2 = jax.random.normal(k3, (Ctot, D), dtype=jnp.float32) * 0.1
    b2 = jax.random.normal(k4, (D,), dtype=jnp.float32) * 0.1

    out = multi_bn_forward(x, w1_raw, b1, w2, b2,
                           num_classes=num_classes, du_per_class=du_per_class)
    out = jax.block_until_ready(out)

    # Pure-JAX reference following the module's op order exactly.
    xf = jnp.transpose(x, (0, 2, 3, 1)).reshape(N, H * W, Cin)
    feat = jnp.maximum(xf @ w1_raw + b1, 0.0)           # concat backbones + ReLU
    y = feat @ w2 + b2                                  # module_afterbackbone_part1 (1x1 conv)
    pooled = jnp.mean(y, axis=1)                        # AdaptiveAvgPool2d + ImgtoVectorView
    g = pooled.reshape(N, num_classes, du_per_class)
    norm = jnp.maximum(jnp.sqrt(jnp.sum(g * g, axis=-1, keepdims=True)), 1e-12)
    ref = (g / norm * 0.1).reshape(N, D)                # AkSplitDimNormalize
    ref = jnp.where(ref > 0, ref, 0.01 * ref)           # LeakyReLU

    assert out.shape == (N, D)
    assert jnp.allclose(out, ref, atol=2e-5, rtol=1e-4), "mismatch vs reference"

    print("KERNEL_OK")
</pallas_src>

<mosaic_0001>
module attributes {stable_mosaic.version = 11 : i64} {
  func.func @_fused_kernel(%arg0: i32, %arg1: memref<16x256xf32, #tpu.memory_space<vmem>>, %arg2: memref<32x16xf32, #tpu.memory_space<vmem>>, %arg3: memref<32x1xf32, #tpu.memory_space<vmem>>, %arg4: memref<32x128xf32, #tpu.memory_space<vmem>>, %arg5: memref<1x128xf32, #tpu.memory_space<vmem>>, %arg6: memref<2x32xf32, #tpu.memory_space<vmem>>, %arg7: memref<128x128xf32, #tpu.memory_space<vmem>>, %arg8: memref<2x128xf32, #tpu.memory_space<vmem>>) attributes {dimension_semantics = [#tpu.dimension_semantics<parallel>], iteration_bounds = array<i64: 1>, scalar_prefetch = 0 : i64, scratch_operands = 0 : i64, tpu.core_type = #tpu.core_type<tc>, window_params = [{transform_indices = @transform_0, window_bounds = array<i64: 16, 256>}, {pipeline_mode = #tpu.pipeline_mode<synchronous>, transform_indices = @transform_1, window_bounds = array<i64: 32, 16>}, {pipeline_mode = #tpu.pipeline_mode<synchronous>, transform_indices = @transform_2, window_bounds = array<i64: 32, 1>}, {pipeline_mode = #tpu.pipeline_mode<synchronous>, transform_indices = @transform_3, window_bounds = array<i64: 32, 128>}, {pipeline_mode = #tpu.pipeline_mode<synchronous>, transform_indices = @transform_4, window_bounds = array<i64: 1, 128>}, {pipeline_mode = #tpu.pipeline_mode<synchronous>, transform_indices = @transform_5, window_bounds = array<i64: 2, 32>}, {pipeline_mode = #tpu.pipeline_mode<synchronous>, transform_indices = @transform_6, window_bounds = array<i64: 128, 128>}, {transform_indices = @transform_7, window_bounds = array<i64: 2, 128>}]} {
    %c0 = arith.constant 0 : index
    %c0_0 = arith.constant 0 : index
    %0 = vector.load %arg2[%c0, %c0_0] : memref<32x16xf32, #tpu.memory_space<vmem>>, vector<32x16xf32>
    %c0_1 = arith.constant 0 : index
    %c0_2 = arith.constant 0 : index
    %1 = vector.load %arg1[%c0_1, %c0_2] : memref<16x256xf32, #tpu.memory_space<vmem>>, vector<16x256xf32>
    %cst = arith.constant dense<0.000000e+00> : vector<32x256xf32>
    %2 = tpu.matmul %0, %1, %cst {dimension_numbers = #tpu.dot_dimension_numbers<[1], [0], [0], [1], [0, 0, 1, 1], [], []>} : vector<32x16xf32>, vector<16x256xf32>, vector<32x256xf32> -> vector<32x256xf32>
    %c0_3 = arith.constant 0 : index
    %c0_4 = arith.constant 0 : index
    %3 = vector.load %arg3[%c0_3, %c0_4] : memref<32x1xf32, #tpu.memory_space<vmem>>, vector<32x1xf32>
    %4 = vector.broadcast %3 : vector<32x1xf32> to vector<32x256xf32>
    %5 = arith.addf %2, %4 : vector<32x256xf32>
    %cst_5 = arith.constant 0.000000e+00 : f32
    %6 = vector.broadcast %cst_5 : f32 to vector<32x256xf32>
    %7 = arith.maximumf %5, %6 : vector<32x256xf32>
    %cst_6 = arith.constant dense<0.000000e+00> : vector<32xf32>
    %8 = vector.multi_reduction <add>, %7, %cst_6 [1] : vector<32x256xf32> to vector<32xf32>
    %9 = vector.shape_cast %8 : vector<32xf32> to vector<32x1xf32>
    %cst_7 = arith.constant 3.906250e-03 : f32
    %10 = vector.broadcast %cst_7 : f32 to vector<32x1xf32>
    %11 = arith.mulf %9, %10 : vector<32x1xf32>
    %c0_8 = arith.constant 0 : index
    %c0_9 = arith.constant 0 : index
    %12 = vector.load %arg6[%c0_8, %c0_9] : memref<2x32xf32, #tpu.memory_space<vmem>>, vector<2x32xf32>
    %c0_10 = arith.constant 0 : index
    %c0_11 = arith.constant 0 : index
    %13 = vector.load %arg4[%c0_10, %c0_11] : memref<32x128xf32, #tpu.memory_space<vmem>>, vector<32x128xf32>
    %14 = vector.broadcast %11 : vector<32x1xf32> to vector<32x128xf32>
    %15 = arith.mulf %14, %13 : vector<32x128xf32>
    %cst_12 = arith.constant dense<0.000000e+00> : vector<2x128xf32>
    %16 = tpu.matmul %12, %15, %cst_12 {dimension_numbers = #tpu.dot_dimension_numbers<[1], [0], [0], [1], [0, 0, 1, 1], [], []>} : vector<2x32xf32>, vector<32x128xf32>, vector<2x128xf32> -> vector<2x128xf32>
    %c0_13 = arith.constant 0 : index
    %c0_14 = arith.constant 0 : index
    %17 = vector.load %arg5[%c0_13, %c0_14] : memref<1x128xf32, #tpu.memory_space<vmem>>, vector<1x128xf32>
    %18 = vector.broadcast %17 : vector<1x128xf32> to vector<2x128xf32>
    %19 = arith.addf %16, %18 : vector<2x128xf32>
    %20 = arith.mulf %19, %19 : vector<2x128xf32>
    %c0_15 = arith.constant 0 : index
    %c0_16 = arith.constant 0 : index
    %21 = vector.load %arg7[%c0_15, %c0_16] : memref<128x128xf32, #tpu.memory_space<vmem>>, vector<128x128xf32>
    %cst_17 = arith.constant dense<0.000000e+00> : vector<2x128xf32>
    %22 = tpu.matmul %20, %21, %cst_17 {dimension_numbers = #tpu.dot_dimension_numbers<[1], [0], [0], [1], [0, 0, 1, 1], [], []>} : vector<2x128xf32>, vector<128x128xf32>, vector<2x128xf32> -> vector<2x128xf32>
    %cst_18 = arith.constant 1.000000e-24 : f32
    %23 = vector.broadcast %cst_18 : f32 to vector<2x128xf32>
    %24 = arith.maximumf %22, %23 : vector<2x128xf32>
    %25 = math.rsqrt %24 : vector<2x128xf32>
    %26 = arith.mulf %19, %25 : vector<2x128xf32>
    %cst_19 = arith.constant 1.000000e-01 : f32
    %27 = vector.broadcast %cst_19 : f32 to vector<2x128xf32>
    %28 = arith.mulf %26, %27 : vector<2x128xf32>
    %cst_20 = arith.constant 0.000000e+00 : f32
    %29 = vector.broadcast %cst_20 : f32 to vector<2x128xf32>
    %30 = arith.cmpf ogt, %28, %29 : vector<2x128xf32>
    %cst_21 = arith.constant 0.00999999977 : f32
    %31 = vector.broadcast %cst_21 : f32 to vector<2x128xf32>
    %32 = arith.mulf %31, %28 : vector<2x128xf32>
    %33 = arith.select %30, %28, %32 : vector<2x128xi1>, vector<2x128xf32>
    %c0_22 = arith.constant 0 : index
    %c0_23 = arith.constant 0 : index
    %34 = vector.load %arg8[%c0_22, %c0_23] : memref<2x128xf32, #tpu.memory_space<vmem>>, vector<2x128xf32>
    tpu.vector_store %arg8[%c0_22, %c0_23], %33 {strides = array<i32>} : memref<2x128xf32, #tpu.memory_space<vmem>>, vector<2x128xf32>,
    return
  }
  func.func @transform_0(%arg0: i32) -> (i32, i32) {
    %c0_i32 = arith.constant 0 : i32
    %c0_i32_0 = arith.constant 0 : i32
    return %arg0, %c0_i32 : i32, i32
  }
  func.func @transform_1(%arg0: i32) -> (i32, i32) {
    %c0_i32 = arith.constant 0 : i32
    %c0_i32_0 = arith.constant 0 : i32
    %c0_i32_1 = arith.constant 0 : i32
    return %c0_i32, %c0_i32_0 : i32, i32
  }
  func.func @transform_2(%arg0: i32) -> (i32, i32) {
    %c0_i32 = arith.constant 0 : i32
    %c0_i32_0 = arith.constant 0 : i32
    %c0_i32_1 = arith.constant 0 : i32
    return %c0_i32, %c0_i32_0 : i32, i32
  }
  func.func @transform_3(%arg0: i32) -> (i32, i32) {
    %c0_i32 = arith.constant 0 : i32
    %c0_i32_0 = arith.constant 0 : i32
    %c0_i32_1 = arith.constant 0 : i32
    return %c0_i32, %c0_i32_0 : i32, i32
  }
  func.func @transform_4(%arg0: i32) -> (i32, i32) {
    %c0_i32 = arith.constant 0 : i32
    %c0_i32_0 = arith.constant 0 : i32
    %c0_i32_1 = arith.constant 0 : i32
    return %c0_i32, %c0_i32_0 : i32, i32
  }
  func.func @transform_5(%arg0: i32) -> (i32, i32) {
    %c0_i32 = arith.constant 0 : i32
    %c0_i32_0 = arith.constant 0 : i32
    %c0_i32_1 = arith.constant 0 : i32
    return %c0_i32, %c0_i32_0 : i32, i32
  }
  func.func @transform_6(%arg0: i32) -> (i32, i32) {
    %c0_i32 = arith.constant 0 : i32
    %c0_i32_0 = arith.constant 0 : i32
    %c0_i32_1 = arith.constant 0 : i32
    return %c0_i32, %c0_i32_0 : i32, i32
  }
  func.func @transform_7(%arg0: i32) -> (i32, i32) {
    %c0_i32 = arith.constant 0 : i32
    %c0_i32_0 = arith.constant 0 : i32
    return %arg0, %c0_i32 : i32, i32
  }
}

</mosaic_0001>

<llo_original>
// kernel: tpu_custom_call.1
$region0: #{tpu_custom_call.1}
  #allocation0 [shape = 'u32[]', space=smem, size = 0x4, offset = 0x4, fixed_abs, tag = 'smem constant byte address 0x4 - core index']
  #allocation1 [shape = 'u32[144,128]{1,0:T(1,128)}', space=vmem, size = 0x12000, scoped, tag = 'internal scratch']
  %s0 = inlined_call_operand.vmem [shape: f32[16,256], index: 0, kind: input, shape index: {}]
  %s1 = inlined_call_operand.vmem [shape: f32[32,16], index: 1, kind: input, shape index: {}]
  %s2 = inlined_call_operand.vmem [shape: f32[32,1], index: 2, kind: input, shape index: {}]
  %s3 = inlined_call_operand.vmem [shape: f32[32,128], index: 3, kind: input, shape index: {}]
  %s4 = inlined_call_operand.vmem [shape: f32[1,128], index: 4, kind: input, shape index: {}]
  %s5 = inlined_call_operand.vmem [shape: f32[2,32], index: 5, kind: input, shape index: {}]
  %s6 = inlined_call_operand.hbm [shape: f32[128,128], index: 6, kind: input, shape index: {}]
  %s7 = inlined_call_operand.hbm [shape: f32[2,128], index: 7, kind: output, shape index: {}]
  %s8 = sld [smem:[#allocation0]]
  $region42: #{tpu_custom_call.1} parent=0
    _
  %s10 = ssub.s32 1, %s8
  %s11 = scalar_select 0, %s10, %s8
  $region1: #{tpu_custom_call.1} parent=0
    #allocation2 [shape = 'u8[65536]{0}', space=vmem, size = 0x10000, scoped, tag = 'input window, operand 6, single buffered']
    #allocation3 [shape = 's32[1]{0}', space=sflag, size = 0x4, scoped, tag = 'scoped memory for tpu_custom_call.1']
    #allocation4 [shape = 's32[1]{0}', space=sflag, size = 0x4, scoped, tag = 'scoped memory for tpu_custom_call.1']
    #allocation5 [shape = 'u8[1024]{0}', space=vmem, size = 0x400, scoped, tag = 'output window, operand 0, single buffered']
    %12 = vsyncpa [#allocation3], 0
    %13 = vsyncpa [#allocation4], 0
    // Predicated region
    $region2: #{tpu_custom_call.1} parent=1 // pred_check
      _
    $region3: #{tpu_custom_call.1} parent=1 // pred_check_branch
      %15 = sbr.rel (0) target = $region5
    $region4: #{tpu_custom_call.1} parent=1 // pred_region
      _
    $region5: #{tpu_custom_call.1} parent=1 // pred_fallthru
      _
    // Predicated region
    $region6: #{tpu_custom_call.1} parent=1 // pred_check
      _
    $region7: #{tpu_custom_call.1} parent=1 // pred_check_branch
      %17 = sbr.rel (0) target = $region9
    $region8: #{tpu_custom_call.1} parent=1 // pred_region
      _
    $region9: #{tpu_custom_call.1} parent=1 // pred_fallthru
      _
    // Predicated region
    $region10: #{tpu_custom_call.1} parent=1 // pred_check
      _
    $region11: #{tpu_custom_call.1} parent=1 // pred_check_branch
      %19 = sbr.rel (0) target = $region13
    $region12: #{tpu_custom_call.1} parent=1 // pred_region
      _
    $region13: #{tpu_custom_call.1} parent=1 // pred_fallthru
      _
    // Predicated region
    $region14: #{tpu_custom_call.1} parent=1 // pred_check
      _
    $region15: #{tpu_custom_call.1} parent=1 // pred_check_branch
      %21 = sbr.rel (0) target = $region17
    $region16: #{tpu_custom_call.1} parent=1 // pred_region
      _
    $region17: #{tpu_custom_call.1} parent=1 // pred_fallthru
      _
    // Predicated region
    $region18: #{tpu_custom_call.1} parent=1 // pred_check
      _
    $region19: #{tpu_custom_call.1} parent=1 // pred_check_branch
      %23 = sbr.rel (0) target = $region21
    $region20: #{tpu_custom_call.1} parent=1 // pred_region
      _
    $region21: #{tpu_custom_call.1} parent=1 // pred_fallthru
      _
    // Predicated region
    $region22: #{tpu_custom_call.1} parent=1 // pred_check
      _
    $region23: #{tpu_custom_call.1} parent=1 // pred_check_branch
      %25 = sbr.rel (0) target = $region25
    $region24: #{tpu_custom_call.1} parent=1 // pred_region
      _
    $region25: #{tpu_custom_call.1} parent=1 // pred_fallthru
      _
    // Predicated region
    $region26: #{tpu_custom_call.1} parent=1 // pred_check
      _
    $region27: #{tpu_custom_call.1} parent=1 // pred_check_branch
      %27 = sbr.rel (0) target = $region29
    $region28: #{tpu_custom_call.1} parent=1 // pred_region
      %s29 = ssub.s32 2048, 2048
      %30 = vsyncadd [#allocation3], %s29
      %s31 = sshll.u32 [#allocation2], 4
      %s32 = int_to_ptr.vmem [resolvable:$true] %s31
      %37 = dma.hbm_to_vmem [thread:$0]  %s6, 2048, %s32, [#allocation3], 128, 128, 8
    $region29: #{tpu_custom_call.1} parent=1 // pred_fallthru
      _
    // Predicated region
    $region30: #{tpu_custom_call.1} parent=1 // pred_check
      _
    $region31: #{tpu_custom_call.1} parent=1 // pred_check_branch
      %39 = sbr.rel (0) target = $region33
    $region32: #{tpu_custom_call.1} parent=1 // pred_region
      %40 = dma.done [#allocation3], 2048
    $region33: #{tpu_custom_call.1} parent=1 // pred_fallthru
      _
    %v41 = vld [vmem:[%s1] sm:$0xff]
    %v42 = vld [vmem:[%s1 + $0x8] sm:$0xff]
    %v43 = vld [vmem:[%s1 + $0x10] sm:$0xff]
    %v44 = vld [vmem:[%s1 + $0x18] sm:$0xff]
    %v45 = vld [vmem:[%s0] sm:$0xff]
    %v46 = vld [vmem:[%s0 + $0x8] sm:$0xff]
    %v47 = vld [vmem:[%s0 + $0x10] sm:$0xff]
    %v48 = vld [vmem:[%s0 + $0x18] sm:$0xff]
    %v49 = vld [vmem:[%s2] sm:$0xff]
    %v50 = vld [vmem:[%s2 + $0x8] sm:$0xff]
    %v51 = vld [vmem:[%s2 + $0x10] sm:$0xff]
    %v52 = vld [vmem:[%s2 + $0x18] sm:$0xff]
    %54 = vset.pattern.permute.xlu0 0
    %55 = vperm.xlu0 %54, %v49
    %v56 = vpop.permute.xlu0 %55
    %59 = vset.pattern.permute.xlu0 0
    %60 = vperm.xlu0 %59, %v50
    %v61 = vpop.permute.xlu0 %60
    %64 = vset.pattern.permute.xlu0 0
    %65 = vperm.xlu0 %64, %v51
    %v66 = vpop.permute.xlu0 %65
    %69 = vset.pattern.permute.xlu0 0
    %70 = vperm.xlu0 %69, %v52
    %v71 = vpop.permute.xlu0 %70
    %vm73 = vcmask 130048
    %v75 = vsel %vm73, %v41, 0
    %v78 = vsel %vm73, %v42, 0
    %v81 = vsel %vm73, %v43, 0
    %v84 = vsel %vm73, %v44, 0
    %86 = vmatprep.subr.mxu0 %v46
    %87 = vmatpush1.msra.mxu0 %v45
    %88 = vmatprep.subr.mxu0 %v48
    %89 = vmatpush1.msra.mxu0 %v47
    %90 = vmatprep.subr.mxu0 0.0
    %91 = vmatpush1.msra.mxu0 0.0
    %92 = vmatprep.subr.mxu0 0.0
    %93 = vmatpush1.msra.mxu0 0.0
    %94 = vmatprep.subr.mxu0 0.0
    %95 = vmatpush1.msra.mxu0 0.0
    %96 = vmatprep.subr.mxu0 0.0
    %97 = vmatpush1.msra.mxu0 0.0
    %98 = vmatprep.subr.mxu0 0.0
    %99 = vmatpush1.msra.mxu0 0.0
    %100 = vmatprep.subr.mxu0 0.0
    %101 = vmatpush1.msra.mxu0 0.0
    %102 = vmatprep.subr.mxu0 0.0
    %103 = vmatpush1.msra.mxu0 0.0
    %104 = vmatprep.subr.mxu0 0.0
    %105 = vmatpush1.msra.mxu0 0.0
    %106 = vmatprep.subr.mxu0 0.0
    %107 = vmatpush1.msra.mxu0 0.0
    %108 = vmatprep.subr.mxu0 0.0
    %109 = vmatpush1.msra.mxu0 0.0
    %110 = vmatprep.subr.mxu0 0.0
    %111 = vmatpush1.msra.mxu0 0.0
    %112 = vmatprep.subr.mxu0 0.0
    %113 = vmatpush1.msra.mxu0 0.0
    %114 = vmatprep.subr.mxu0 0.0
    %115 = vmatpush1.msra.mxu0 0.0
    %116 = vmatprep.subr.mxu0 0.0
    %117 = vmatpush1.msra.mxu0 0.0
    %118 = vmatprep.subr.mxu0 0.0
    %119 = vmatpush1.msra.mxu0 0.0
    %120 = vmatprep.subr.mxu0 0.0
    %121 = vmatpush1.msra.mxu0 0.0
    %122 = vmatprep.subr.mxu0 0.0
    %123 = vmatpush1.msra.mxu0 0.0
    %124 = vmatprep.subr.mxu0 0.0
    %125 = vmatpush1.msra.mxu0 0.0
    %126 = vmatprep.subr.mxu0 0.0
    %127 = vmatpush1.msra.mxu0 0.0
    %128 = vmatprep.subr.mxu0 0.0
    %129 = vmatpush1.msra.mxu0 0.0
    %130 = vmatprep.subr.mxu0 0.0
    %131 = vmatpush1.msra.mxu0 0.0
    %132 = vmatprep.subr.mxu0 0.0
    %133 = vmatpush1.msra.mxu0 0.0
    %134 = vmatprep.subr.mxu0 0.0
    %135 = vmatpush1.msra.mxu0 0.0
    %136 = vmatprep.subr.mxu0 0.0
    %137 = vmatpush1.msra.mxu0 0.0
    %138 = vmatprep.subr.mxu0 0.0
    %139 = vmatpush1.msra.mxu0 0.0
    %140 = vmatprep.subr.mxu0 0.0
    %141 = vmatpush1.msra.mxu0 0.0
    %142 = vmatprep.subr.mxu0 0.0
    %143 = vmatpush1.msra.mxu0 0.0
    %144 = vmatprep.subr.mxu0 0.0
    %145 = vmatpush1.msra.mxu0 0.0
    %146 = vmatprep.subr.mxu0 0.0
    %147 = vmatpush1.msra.mxu0 0.0
    %148 = vmatprep.subr.mxu0 0.0
    %149 = vmatpush1.msra.mxu0 0.0
    %150 = vmatprep.mubr.f32.mxu0 0.0
    %151 = vmatmul.mubr.f32.gmra.mrb[0].mxu0 %v75
    %v152 = vpop.f32.mrb[0].mxu0
    %v153 = vadd.f32 %v56, %v152
    %v154 = vpop.f32.mrb[0].mxu0
    %v155 = vadd.f32 %v56, %v154
    %156 = vmatprep.mubr.f32.mxu0 0.0
    %157 = vmatmul.mubr.f32.gmra.mrb[0].mxu0 %v78
    %v158 = vpop.f32.mrb[0].mxu0
    %v159 = vadd.f32 %v61, %v158
    %v160 = vpop.f32.mrb[0].mxu0
    %v161 = vadd.f32 %v61, %v160
    %162 = vmatprep.mubr.f32.mxu0 0.0
    %163 = vmatmul.mubr.f32.gmra.mrb[0].mxu0 %v81
    %v164 = vpop.f32.mrb[0].mxu0
    %v165 = vadd.f32 %v66, %v164
    %v166 = vpop.f32.mrb[0].mxu0
    %v167 = vadd.f32 %v66, %v166
    %168 = vmatprep.mubr.f32.mxu0 0.0
    %169 = vmatmul.mubr.f32.gmra.mrb[0].mxu0 %v84
    %v170 = vpop.f32.mrb[0].mxu0
    %v171 = vadd.f32 %v71, %v170
    %v172 = vpop.f32.mrb[0].mxu0
    %v173 = vadd.f32 %v71, %v172
    %174 = vdwg.mxu0
    %v175 = vmax.f32 %v153, 0.0
    %v176 = vmax.f32 %v155, 0.0
    %v177 = vmax.f32 %v159, 0.0
    %v178 = vmax.f32 %v161, 0.0
    %v179 = vmax.f32 %v165, 0.0
    %v180 = vmax.f32 %v167, 0.0
    %v181 = vmax.f32 %v171, 0.0
    %v182 = vmax.f32 %v173, 0.0
    %v183 = vadd.f32 %v175, %v176
    %184 = vadd.xlane.f32.xlu0 %v183
    %v185 = vpop.xlane.xlu0 %184
    %v186 = vadd.f32 %v177, %v178
    %187 = vadd.xlane.f32.xlu0 %v186
    %v188 = vpop.xlane.xlu0 %187
    %v189 = vadd.f32 %v179, %v180
    %190 = vadd.xlane.f32.xlu0 %v189
    %v191 = vpop.xlane.xlu0 %190
    %v192 = vadd.f32 %v181, %v182
    %193 = vadd.xlane.f32.xlu0 %v192
    %v194 = vpop.xlane.xlu0 %193
    %v195 = vmul.f32 %v185, 0.00390625
    %v196 = vmul.f32 %v188, 0.00390625
    %v197 = vmul.f32 %v191, 0.00390625
    %v198 = vmul.f32 %v194, 0.00390625
    %v199 = vld [vmem:[%s5] sm:$0x3]
    %v200 = vld [vmem:[%s3] sm:$0xff]
    %v201 = vld [vmem:[%s3 + $0x8] sm:$0xff]
    %v202 = vld [vmem:[%s3 + $0x10] sm:$0xff]
    %v203 = vld [vmem:[%s3 + $0x18] sm:$0xff]
    %v204 = vmul.f32 %v195, %v200
    %v205 = vmul.f32 %v196, %v201
    %v206 = vmul.f32 %v197, %v202
    %v207 = vmul.f32 %v198, %v203
    %v208 = vld [vmem:[%s4] sm:$0x1]
    %v210 = vlaneseq
    %v211 = vshrl.u32 %v210, 7
    %v212 = vsub.s32 0, %v211
    %v213 = vrot.slane %v208, %v212
    %vm215 = vcmask 261120
    %v217 = vsel %vm215, %v199, 0
    %219 = vmatprep.subr.mxu0 0.0
    %220 = vmatpush1.msra.mxu0 %v204
    %221 = vmatprep.subr.mxu0 0.0
    %222 = vmatpush1.msra.mxu0 %v205
    %223 = vmatprep.subr.mxu0 0.0
    %224 = vmatpush1.msra.mxu0 %v206
    %225 = vmatprep.subr.mxu0 0.0
    %226 = vmatpush1.msra.mxu0 %v207
    %227 = vmatprep.subr.mxu0 0.0
    %228 = vmatpush1.msra.mxu0 0.0
    %229 = vmatprep.subr.mxu0 0.0
    %230 = vmatpush1.msra.mxu0 0.0
    %231 = vmatprep.subr.mxu0 0.0
    %232 = vmatpush1.msra.mxu0 0.0
    %233 = vmatprep.subr.mxu0 0.0
    %234 = vmatpush1.msra.mxu0 0.0
    %235 = vmatprep.subr.mxu0 0.0
    %236 = vmatpush1.msra.mxu0 0.0
    %237 = vmatprep.subr.mxu0 0.0
    %238 = vmatpush1.msra.mxu0 0.0
    %239 = vmatprep.subr.mxu0 0.0
    %240 = vmatpush1.msra.mxu0 0.0
    %241 = vmatprep.subr.mxu0 0.0
    %242 = vmatpush1.msra.mxu0 0.0
    %243 = vmatprep.subr.mxu0 0.0
    %244 = vmatpush1.msra.mxu0 0.0
    %245 = vmatprep.subr.mxu0 0.0
    %246 = vmatpush1.msra.mxu0 0.0
    %247 = vmatprep.subr.mxu0 0.0
    %248 = vmatpush1.msra.mxu0 0.0
    %249 = vmatprep.subr.mxu0 0.0
    %250 = vmatpush1.msra.mxu0 0.0
    %251 = vmatprep.subr.mxu0 0.0
    %252 = vmatpush1.msra.mxu0 0.0
    %253 = vmatprep.subr.mxu0 0.0
    %254 = vmatpush1.msra.mxu0 0.0
    %255 = vmatprep.subr.mxu0 0.0
    %256 = vmatpush1.msra.mxu0 0.0
    %257 = vmatprep.subr.mxu0 0.0
    %258 = vmatpush1.msra.mxu0 0.0
    %259 = vmatprep.subr.mxu0 0.0
    %260 = vmatpush1.msra.mxu0 0.0
    %261 = vmatprep.subr.mxu0 0.0
    %262 = vmatpush1.msra.mxu0 0.0
    %263 = vmatprep.subr.mxu0 0.0
    %264 = vmatpush1.msra.mxu0 0.0
    %265 = vmatprep.subr.mxu0 0.0
    %266 = vmatpush1.msra.mxu0 0.0
    %267 = vmatprep.subr.mxu0 0.0
    %268 = vmatpush1.msra.mxu0 0.0
    %269 = vmatprep.subr.mxu0 0.0
    %270 = vmatpush1.msra.mxu0 0.0
    %271 = vmatprep.subr.mxu0 0.0
    %272 = vmatpush1.msra.mxu0 0.0
    %273 = vmatprep.subr.mxu0 0.0
    %274 = vmatpush1.msra.mxu0 0.0
    %275 = vmatprep.subr.mxu0 0.0
    %276 = vmatpush1.msra.mxu0 0.0
    %277 = vmatprep.subr.mxu0 0.0
    %278 = vmatpush1.msra.mxu0 0.0
    %279 = vmatprep.subr.mxu0 0.0
    %280 = vmatpush1.msra.mxu0 0.0
    %281 = vmatprep.subr.mxu0 0.0
    %282 = vmatpush1.msra.mxu0 0.0
    %283 = vmatprep.mubr.f32.mxu0 0.0
    %284 = vmatmul.mubr.f32.gmra.mrb[0].mxu0 %v217
    %v285 = vpop.f32.mrb[0].mxu0
    %v286 = vadd.f32 %v213, %v285
    %v287 = vpop.f32.mrb[0].mxu0
    %288 = vdwg.mxu0
    %v289 = vmul.f32 %v286, %v286
    %v290 = vld [vmem:[#allocation2] sm:$0xff]
    %v291 = vld [vmem:[#allocation2 + $0x8] sm:$0xff]
    %v292 = vld [vmem:[#allocation2 + $0x10] sm:$0xff]
    %v293 = vld [vmem:[#allocation2 + $0x18] sm:$0xff]
    %v294 = vld [vmem:[#allocation2 + $0x20] sm:$0xff]
    %v295 = vld [vmem:[#allocation2 + $0x28] sm:$0xff]
    %v296 = vld [vmem:[#allocation2 + $0x30] sm:$0xff]
    %v297 = vld [vmem:[#allocation2 + $0x38] sm:$0xff]
    %v298 = vld [vmem:[#allocation2 + $0x40] sm:$0xff]
    %v299 = vld [vmem:[#allocation2 + $0x48] sm:$0xff]
    %v300 = vld [vmem:[#allocation2 + $0x50] sm:$0xff]
    %v301 = vld [vmem:[#allocation2 + $0x58] sm:$0xff]
    %v302 = vld [vmem:[#allocation2 + $0x60] sm:$0xff]
    %v303 = vld [vmem:[#allocation2 + $0x68] sm:$0xff]
    %v304 = vld [vmem:[#allocation2 + $0x70] sm:$0xff]
    %v305 = vld [vmem:[#allocation2 + $0x78] sm:$0xff]
    %306 = vmatprep.subr.mxu0 0.0
    %307 = vmatpush1.msra.mxu0 %v290
    %308 = vmatprep.subr.mxu0 0.0
    %309 = vmatpush1.msra.mxu0 %v291
    %310 = vmatprep.subr.mxu0 0.0
    %311 = vmatpush1.msra.mxu0 %v292
    %312 = vmatprep.subr.mxu0 0.0
    %313 = vmatpush1.msra.mxu0 %v293
    %314 = vmatprep.subr.mxu0 0.0
    %315 = vmatpush1.msra.mxu0 %v294
    %316 = vmatprep.subr.mxu0 0.0
    %317 = vmatpush1.msra.mxu0 %v295
    %318 = vmatprep.subr.mxu0 0.0
    %319 = vmatpush1.msra.mxu0 %v296
    %320 = vmatprep.subr.mxu0 0.0
    %321 = vmatpush1.msra.mxu0 %v297
    %322 = vmatprep.subr.mxu0 0.0
    %323 = vmatpush1.msra.mxu0 %v298
    %324 = vmatprep.subr.mxu0 0.0
    %325 = vmatpush1.msra.mxu0 %v299
    %326 = vmatprep.subr.mxu0 0.0
    %327 = vmatpush1.msra.mxu0 %v300
    %328 = vmatprep.subr.mxu0 0.0
    %329 = vmatpush1.msra.mxu0 %v301
    %330 = vmatprep.subr.mxu0 0.0
    %331 = vmatpush1.msra.mxu0 %v302
    %332 = vmatprep.subr.mxu0 0.0
    %333 = vmatpush1.msra.mxu0 %v303
    %334 = vmatprep.subr.mxu0 0.0
    %335 = vmatpush1.msra.mxu0 %v304
    %336 = vmatprep.subr.mxu0 0.0
    %337 = vmatpush1.msra.mxu0 %v305
    %338 = vmatprep.subr.mxu0 0.0
    %339 = vmatpush1.msra.mxu0 0.0
    %340 = vmatprep.subr.mxu0 0.0
    %341 = vmatpush1.msra.mxu0 0.0
    %342 = vmatprep.subr.mxu0 0.0
    %343 = vmatpush1.msra.mxu0 0.0
    %344 = vmatprep.subr.mxu0 0.0
    %345 = vmatpush1.msra.mxu0 0.0
    %346 = vmatprep.subr.mxu0 0.0
    %347 = vmatpush1.msra.mxu0 0.0
    %348 = vmatprep.subr.mxu0 0.0
    %349 = vmatpush1.msra.mxu0 0.0
    %350 = vmatprep.subr.mxu0 0.0
    %351 = vmatpush1.msra.mxu0 0.0
    %352 = vmatprep.subr.mxu0 0.0
    %353 = vmatpush1.msra.mxu0 0.0
    %354 = vmatprep.subr.mxu0 0.0
    %355 = vmatpush1.msra.mxu0 0.0
    %356 = vmatprep.subr.mxu0 0.0
    %357 = vmatpush1.msra.mxu0 0.0
    %358 = vmatprep.subr.mxu0 0.0
    %359 = vmatpush1.msra.mxu0 0.0
    %360 = vmatprep.subr.mxu0 0.0
    %361 = vmatpush1.msra.mxu0 0.0
    %362 = vmatprep.subr.mxu0 0.0
    %363 = vmatpush1.msra.mxu0 0.0
    %364 = vmatprep.subr.mxu0 0.0
    %365 = vmatpush1.msra.mxu0 0.0
    %366 = vmatprep.subr.mxu0 0.0
    %367 = vmatpush1.msra.mxu0 0.0
    %368 = vmatprep.subr.mxu0 0.0
    %369 = vmatpush1.msra.mxu0 0.0
    %370 = vmatprep.mubr.f32.mxu0 0.0
    %371 = vmatmul.mubr.f32.gmra.mrb[0].mxu0 %v289
    %v372 = vpop.f32.mrb[0].mxu0
    %v373 = vadd.f32 0.0, %v372
    %v374 = vpop.f32.mrb[0].mxu0
    %375 = vdwg.mxu0
    %v376 = vmax.f32 %v373, 1e-24
    %v377 = vrsqrt.pop %v376
    %v378 = vmul.f32 %v286, %v377
    %v379 = vmul.f32 %v378, 0.1
    %vm380 = vcmp.gt.f32.partialorder %v379, 0.0
    %v381 = vmul.f32 %v379, 0.01
    %v382 = vsel %vm380, %v379, %v381
    %383 = vst [vmem:[#allocation5] sm:$0x3] %v382
    // Predicated region
    $region34: #{tpu_custom_call.1} parent=1 // pred_check
      _
    $region35: #{tpu_custom_call.1} parent=1 // pred_check_branch
      %385 = sbr.rel (0) target = $region37
    $region36: #{tpu_custom_call.1} parent=1 // pred_region
      %s387 = ssub.s32 32, 32
      %388 = vsyncadd [#allocation4], %s387
      %s390 = sshll.u32 [#allocation5], 4
      %s391 = int_to_ptr.vmem [resolvable:$true] %s390
      %393 = dma.vmem_to_hbm [thread:$0]  %s391, 32, %s7, [#allocation4]
    $region37: #{tpu_custom_call.1} parent=1 // pred_fallthru
      _
    // Predicated region
    $region38: #{tpu_custom_call.1} parent=1 // pred_check
      _
    $region39: #{tpu_custom_call.1} parent=1 // pred_check_branch
      %395 = sbr.rel (0) target = $region41
    $region40: #{tpu_custom_call.1} parent=1 // pred_region
      %396 = dma.done [#allocation4], 32
    $region41: #{tpu_custom_call.1} parent=1 // pred_fallthru
      _
    %397 = vsyncpa [#allocation3], 1
    %398 = vsyncpa [#allocation4], 1

</llo_original>
